<compile_context>
chip_gen: v6e
topology: v6e:2x2x1
jax: 0.10.0
libtpu: 0.0.40
codegen_flags: <defaults>
</compile_context>

<pallas_src>
import jax
import jax.numpy as jnp
from jax.experimental import pallas as pl
from jax.experimental.pallas import tpu as pltpu


def _round_up(n, m):
    return ((n + m - 1) // m) * m


def mlp_kernel(x_ref,
               w12_ref, b12_ref,
               w3_ref, b3_ref,
               w4_ref, b4_ref,
               o_ref):
    cdt = w12_ref.dtype                      # compute dtype (f32 default, bf16 opt-in)
    x = x_ref[...].astype(cdt)

    # fused linear1+linear2 (no activation between them in the PyTorch forward),
    # then the ReLU that follows linear2
    h = jnp.dot(x, w12_ref[...], preferred_element_type=jnp.float32) + b12_ref[...]
    h = jnp.maximum(h, 0.0).astype(cdt)

    # linear3 + ReLU
    h = jnp.dot(h, w3_ref[...], preferred_element_type=jnp.float32) + b3_ref[...]
    h = jnp.maximum(h, 0.0).astype(cdt)

    # linear4: real class width only (out_dim lanes, no 128-lane padding)
    logits = jnp.dot(h, w4_ref[...], preferred_element_type=jnp.float32) + b4_ref[...]

    # numerically stable softmax over the (small) class axis; exact normalization
    m = jnp.max(logits, axis=-1, keepdims=True)
    e = jnp.exp(logits - m)
    s = jnp.sum(e, axis=-1, keepdims=True)
    inv = 1.0 / s                            # exact; (tb, 1) divides only
    o_ref[...] = (e * inv).astype(o_ref.dtype)


def mlp_forward(x, params, tile_b=2048, compute_dtype=jnp.float32):
    (w1, b1), (w2, b2), (w3, b3), (w4, b4) = params
    batch, in_dim = x.shape
    out_dim = w4.shape[1]

    # ---- offline algebraic fusion of linear1/linear2 (exact up to f32 rounding)
    w1f, w2f = w1.astype(jnp.float32), w2.astype(jnp.float32)
    w12 = w1f @ w2f                                          # (in_dim, 97)
    b12 = b1.astype(jnp.float32) @ w2f + b2.astype(jnp.float32)  # (97,)

    # weights in compute dtype (bf16 recommended on v5e), biases kept f32
    w12c = w12.astype(compute_dtype)
    w3c = w3.astype(compute_dtype)
    w4c = w4.astype(compute_dtype)
    b12r = b12.reshape(1, -1).astype(jnp.float32)
    b3r = b3.reshape(1, -1).astype(jnp.float32)
    b4r = b4.reshape(1, -1).astype(jnp.float32)

    # ---- batch tiling: no wrapper-side padding, ragged last block is clamped
    tb = min(tile_b, _round_up(batch, 8))          # sublane-aligned tile
    n_tiles = pl.cdiv(batch, tb)

    # v7x has 2 TensorCores/chip: force the batch-tile axis across both cores.
    dim_sem = ("parallel",)
    if n_tiles >= 2:
        try:
            kind = jax.devices()[0].device_kind.lower()
            if ("v7" in kind) or ("7x" in kind):
                dim_sem = (pltpu.CORE_PARALLEL,)
        except Exception:
            pass

    weights = (w12c, b12r, w3c, b3r, w4c, b4r)

    out = pl.pallas_call(
        mlp_kernel,
        grid=(n_tiles,),
        in_specs=[pl.BlockSpec((tb, in_dim), lambda i: (i, 0))]
                 # tiny weights/biases stay VMEM-resident across all batch tiles
                 + [pl.BlockSpec(w.shape, lambda i: (0, 0)) for w in weights],
        out_specs=pl.BlockSpec((tb, out_dim), lambda i: (i, 0)),
        out_shape=jax.ShapeDtypeStruct((batch, out_dim), jnp.float32),
        compiler_params=pltpu.CompilerParams(
            dimension_semantics=dim_sem,
            vmem_limit_bytes=32 * 1024 * 1024),
    )(x, *weights)

    return out


def init_linear(key, fan_in, fan_out):
    # deterministic init mimicking PyTorch's default U(-1/sqrt(fan_in), 1/sqrt(fan_in))
    kw, kb = jax.random.split(key)
    bound = 1.0 / jnp.sqrt(jnp.float32(fan_in))
    w = jax.random.uniform(kw, (fan_in, fan_out), jnp.float32, -bound, bound)
    b = jax.random.uniform(kb, (fan_out,), jnp.float32, -bound, bound)
    return w, b


if __name__ == "__main__":
    key = jax.random.PRNGKey(0)
    k_x, k1, k2, k3, k4 = jax.random.split(key, 5)

    batch = 8
    input_dim = 13   # tabular feature count after dropping the label column
    output_dim = 7   # 대출등급 has 7 loan-grade classes

    x = jax.random.normal(k_x, (batch, input_dim), jnp.float32)

    params = (
        init_linear(k1, input_dim, 19),
        init_linear(k2, 19, 97),
        init_linear(k3, 97, 9),
        init_linear(k4, 9, output_dim),
    )

    out = mlp_forward(x, params)
    out = jax.block_until_ready(out)

    # pure-JAX reference (unfused, exact forward order of the PyTorch module)
    def ref(x, params):
        (w1, b1), (w2, b2), (w3, b3), (w4, b4) = params
        h = x @ w1 + b1
        h = jnp.maximum(h @ w2 + b2, 0.0)
        h = jnp.maximum(h @ w3 + b3, 0.0)
        logits = h @ w4 + b4
        return jax.nn.softmax(logits, axis=-1)

    expected = ref(x, params)
    assert out.shape == (batch, output_dim)
    assert jnp.allclose(out, expected, atol=1e-4), "mismatch vs reference"
    assert jnp.allclose(jnp.sum(out, axis=-1), 1.0, atol=1e-4), "softmax rows must sum to 1"

    print("KERNEL_OK")
</pallas_src>

<mosaic_0001>
module attributes {stable_mosaic.version = 11 : i64} {
  func.func @mlp_kernel(%arg0: i32, %arg1: memref<8x13xf32, #tpu.memory_space<vmem>>, %arg2: memref<13x97xf32, #tpu.memory_space<vmem>>, %arg3: memref<1x97xf32, #tpu.memory_space<vmem>>, %arg4: memref<97x9xf32, #tpu.memory_space<vmem>>, %arg5: memref<1x9xf32, #tpu.memory_space<vmem>>, %arg6: memref<9x7xf32, #tpu.memory_space<vmem>>, %arg7: memref<1x7xf32, #tpu.memory_space<vmem>>, %arg8: memref<8x7xf32, #tpu.memory_space<vmem>>) attributes {dimension_semantics = [#tpu.dimension_semantics<parallel>], iteration_bounds = array<i64: 1>, scalar_prefetch = 0 : i64, scratch_operands = 0 : i64, tpu.core_type = #tpu.core_type<tc>, window_params = [{transform_indices = @transform_0, window_bounds = array<i64: 8, 13>}, {pipeline_mode = #tpu.pipeline_mode<synchronous>, transform_indices = @transform_1, window_bounds = array<i64: 13, 97>}, {pipeline_mode = #tpu.pipeline_mode<synchronous>, transform_indices = @transform_2, window_bounds = array<i64: 1, 97>}, {pipeline_mode = #tpu.pipeline_mode<synchronous>, transform_indices = @transform_3, window_bounds = array<i64: 97, 9>}, {pipeline_mode = #tpu.pipeline_mode<synchronous>, transform_indices = @transform_4, window_bounds = array<i64: 1, 9>}, {pipeline_mode = #tpu.pipeline_mode<synchronous>, transform_indices = @transform_5, window_bounds = array<i64: 9, 7>}, {pipeline_mode = #tpu.pipeline_mode<synchronous>, transform_indices = @transform_6, window_bounds = array<i64: 1, 7>}, {transform_indices = @transform_7, window_bounds = array<i64: 8, 7>}]} {
    %c0 = arith.constant 0 : index
    %c0_0 = arith.constant 0 : index
    %0 = vector.load %arg1[%c0, %c0_0] : memref<8x13xf32, #tpu.memory_space<vmem>>, vector<8x13xf32>
    %c0_1 = arith.constant 0 : index
    %c0_2 = arith.constant 0 : index
    %1 = vector.load %arg2[%c0_1, %c0_2] : memref<13x97xf32, #tpu.memory_space<vmem>>, vector<13x97xf32>
    %cst = arith.constant dense<0.000000e+00> : vector<8x97xf32>
    %2 = tpu.matmul %0, %1, %cst {dimension_numbers = #tpu.dot_dimension_numbers<[1], [0], [0], [1], [0, 0, 1, 1], [], []>} : vector<8x13xf32>, vector<13x97xf32>, vector<8x97xf32> -> vector<8x97xf32>
    %c0_3 = arith.constant 0 : index
    %c0_4 = arith.constant 0 : index
    %3 = vector.load %arg3[%c0_3, %c0_4] : memref<1x97xf32, #tpu.memory_space<vmem>>, vector<1x97xf32>
    %4 = vector.broadcast %3 : vector<1x97xf32> to vector<8x97xf32>
    %5 = arith.addf %2, %4 : vector<8x97xf32>
    %cst_5 = arith.constant 0.000000e+00 : f32
    %6 = vector.broadcast %cst_5 : f32 to vector<8x97xf32>
    %7 = arith.maximumf %5, %6 : vector<8x97xf32>
    %c0_6 = arith.constant 0 : index
    %c0_7 = arith.constant 0 : index
    %8 = vector.load %arg4[%c0_6, %c0_7] : memref<97x9xf32, #tpu.memory_space<vmem>>, vector<97x9xf32>
    %cst_8 = arith.constant dense<0.000000e+00> : vector<8x9xf32>
    %9 = tpu.matmul %7, %8, %cst_8 {dimension_numbers = #tpu.dot_dimension_numbers<[1], [0], [0], [1], [0, 0, 1, 1], [], []>} : vector<8x97xf32>, vector<97x9xf32>, vector<8x9xf32> -> vector<8x9xf32>
    %c0_9 = arith.constant 0 : index
    %c0_10 = arith.constant 0 : index
    %10 = vector.load %arg5[%c0_9, %c0_10] : memref<1x9xf32, #tpu.memory_space<vmem>>, vector<1x9xf32>
    %11 = vector.broadcast %10 : vector<1x9xf32> to vector<8x9xf32>
    %12 = arith.addf %9, %11 : vector<8x9xf32>
    %cst_11 = arith.constant 0.000000e+00 : f32
    %13 = vector.broadcast %cst_11 : f32 to vector<8x9xf32>
    %14 = arith.maximumf %12, %13 : vector<8x9xf32>
    %c0_12 = arith.constant 0 : index
    %c0_13 = arith.constant 0 : index
    %15 = vector.load %arg6[%c0_12, %c0_13] : memref<9x7xf32, #tpu.memory_space<vmem>>, vector<9x7xf32>
    %cst_14 = arith.constant dense<0.000000e+00> : vector<8x7xf32>
    %16 = tpu.matmul %14, %15, %cst_14 {dimension_numbers = #tpu.dot_dimension_numbers<[1], [0], [0], [1], [0, 0, 1, 1], [], []>} : vector<8x9xf32>, vector<9x7xf32>, vector<8x7xf32> -> vector<8x7xf32>
    %c0_15 = arith.constant 0 : index
    %c0_16 = arith.constant 0 : index
    %17 = vector.load %arg7[%c0_15, %c0_16] : memref<1x7xf32, #tpu.memory_space<vmem>>, vector<1x7xf32>
    %18 = vector.broadcast %17 : vector<1x7xf32> to vector<8x7xf32>
    %19 = arith.addf %16, %18 : vector<8x7xf32>
    %cst_17 = arith.constant dense<0xFF800000> : vector<8xf32>
    %20 = vector.multi_reduction <maximumf>, %19, %cst_17 [1] : vector<8x7xf32> to vector<8xf32>
    %21 = vector.shape_cast %20 : vector<8xf32> to vector<8x1xf32>
    %22 = vector.broadcast %21 : vector<8x1xf32> to vector<8x7xf32>
    %23 = arith.subf %19, %22 : vector<8x7xf32>
    %24 = math.exp %23 : vector<8x7xf32>
    %cst_18 = arith.constant dense<0.000000e+00> : vector<8xf32>
    %25 = vector.multi_reduction <add>, %24, %cst_18 [1] : vector<8x7xf32> to vector<8xf32>
    %26 = vector.shape_cast %25 : vector<8xf32> to vector<8x1xf32>
    %cst_19 = arith.constant 1.000000e+00 : f32
    %27 = vector.broadcast %cst_19 : f32 to vector<8x1xf32>
    %28 = arith.divf %27, %26 : vector<8x1xf32>
    %29 = vector.broadcast %28 : vector<8x1xf32> to vector<8x7xf32>
    %30 = arith.mulf %24, %29 : vector<8x7xf32>
    %c0_20 = arith.constant 0 : index
    %c0_21 = arith.constant 0 : index
    %31 = vector.load %arg8[%c0_20, %c0_21] : memref<8x7xf32, #tpu.memory_space<vmem>>, vector<8x7xf32>
    tpu.vector_store %arg8[%c0_20, %c0_21], %30 {strides = array<i32>} : memref<8x7xf32, #tpu.memory_space<vmem>>, vector<8x7xf32>,
    return
  }
  func.func @transform_0(%arg0: i32) -> (i32, i32) {
    %c0_i32 = arith.constant 0 : i32
    %c0_i32_0 = arith.constant 0 : i32
    return %arg0, %c0_i32 : i32, i32
  }
  func.func @transform_1(%arg0: i32) -> (i32, i32) {
    %c0_i32 = arith.constant 0 : i32
    %c0_i32_0 = arith.constant 0 : i32
    %c0_i32_1 = arith.constant 0 : i32
    return %c0_i32, %c0_i32_0 : i32, i32
  }
  func.func @transform_2(%arg0: i32) -> (i32, i32) {
    %c0_i32 = arith.constant 0 : i32
    %c0_i32_0 = arith.constant 0 : i32
    %c0_i32_1 = arith.constant 0 : i32
    return %c0_i32, %c0_i32_0 : i32, i32
  }
  func.func @transform_3(%arg0: i32) -> (i32, i32) {
    %c0_i32 = arith.constant 0 : i32
    %c0_i32_0 = arith.constant 0 : i32
    %c0_i32_1 = arith.constant 0 : i32
    return %c0_i32, %c0_i32_0 : i32, i32
  }
  func.func @transform_4(%arg0: i32) -> (i32, i32) {
    %c0_i32 = arith.constant 0 : i32
    %c0_i32_0 = arith.constant 0 : i32
    %c0_i32_1 = arith.constant 0 : i32
    return %c0_i32, %c0_i32_0 : i32, i32
  }
  func.func @transform_5(%arg0: i32) -> (i32, i32) {
    %c0_i32 = arith.constant 0 : i32
    %c0_i32_0 = arith.constant 0 : i32
    %c0_i32_1 = arith.constant 0 : i32
    return %c0_i32, %c0_i32_0 : i32, i32
  }
  func.func @transform_6(%arg0: i32) -> (i32, i32) {
    %c0_i32 = arith.constant 0 : i32
    %c0_i32_0 = arith.constant 0 : i32
    %c0_i32_1 = arith.constant 0 : i32
    return %c0_i32, %c0_i32_0 : i32, i32
  }
  func.func @transform_7(%arg0: i32) -> (i32, i32) {
    %c0_i32 = arith.constant 0 : i32
    %c0_i32_0 = arith.constant 0 : i32
    return %arg0, %c0_i32 : i32, i32
  }
}

</mosaic_0001>

<llo_original>
// kernel: tpu_custom_call.1
$region0: #{tpu_custom_call.1}
  #allocation0 [shape = 'u32[]', space=smem, size = 0x4, offset = 0x4, fixed_abs, tag = 'smem constant byte address 0x4 - core index']
  #allocation1 [shape = 'u32[144,128]{1,0:T(1,128)}', space=vmem, size = 0x12000, scoped, tag = 'internal scratch']
  %s0 = inlined_call_operand.vmem [shape: f32[8,13], index: 0, kind: input, shape index: {}]
  %s1 = inlined_call_operand.vmem [shape: f32[13,97], index: 1, kind: input, shape index: {}]
  %s2 = inlined_call_operand.vmem [shape: f32[1,97], index: 2, kind: input, shape index: {}]
  %s3 = inlined_call_operand.vmem [shape: f32[97,9], index: 3, kind: input, shape index: {}]
  %s4 = inlined_call_operand.vmem [shape: f32[1,9], index: 4, kind: input, shape index: {}]
  %s5 = inlined_call_operand.vmem [shape: f32[9,7], index: 5, kind: input, shape index: {}]
  %s6 = inlined_call_operand.vmem [shape: f32[1,7], index: 6, kind: input, shape index: {}]
  %s7 = inlined_call_operand.hbm [shape: f32[8,7], index: 7, kind: output, shape index: {}]
  %s8 = sld [smem:[#allocation0]]
  $region38: #{tpu_custom_call.1} parent=0
    _
  %s10 = ssub.s32 1, %s8
  %s11 = scalar_select 0, %s10, %s8
  $region1: #{tpu_custom_call.1} parent=0
    #allocation2 [shape = 'u8[4096]{0}', space=vmem, size = 0x1000, scoped, tag = 'output window, operand 0, single buffered']
    #allocation3 [shape = 's32[1]{0}', space=sflag, size = 0x4, scoped, tag = 'scoped memory for tpu_custom_call.1']
    %12 = vsyncpa [#allocation3], 0
    // Predicated region
    $region2: #{tpu_custom_call.1} parent=1 // pred_check
      _
    $region3: #{tpu_custom_call.1} parent=1 // pred_check_branch
      %14 = sbr.rel (0) target = $region5
    $region4: #{tpu_custom_call.1} parent=1 // pred_region
      _
    $region5: #{tpu_custom_call.1} parent=1 // pred_fallthru
      _
    // Predicated region
    $region6: #{tpu_custom_call.1} parent=1 // pred_check
      _
    $region7: #{tpu_custom_call.1} parent=1 // pred_check_branch
      %16 = sbr.rel (0) target = $region9
    $region8: #{tpu_custom_call.1} parent=1 // pred_region
      _
    $region9: #{tpu_custom_call.1} parent=1 // pred_fallthru
      _
    // Predicated region
    $region10: #{tpu_custom_call.1} parent=1 // pred_check
      _
    $region11: #{tpu_custom_call.1} parent=1 // pred_check_branch
      %18 = sbr.rel (0) target = $region13
    $region12: #{tpu_custom_call.1} parent=1 // pred_region
      _
    $region13: #{tpu_custom_call.1} parent=1 // pred_fallthru
      _
    // Predicated region
    $region14: #{tpu_custom_call.1} parent=1 // pred_check
      _
    $region15: #{tpu_custom_call.1} parent=1 // pred_check_branch
      %20 = sbr.rel (0) target = $region17
    $region16: #{tpu_custom_call.1} parent=1 // pred_region
      _
    $region17: #{tpu_custom_call.1} parent=1 // pred_fallthru
      _
    // Predicated region
    $region18: #{tpu_custom_call.1} parent=1 // pred_check
      _
    $region19: #{tpu_custom_call.1} parent=1 // pred_check_branch
      %22 = sbr.rel (0) target = $region21
    $region20: #{tpu_custom_call.1} parent=1 // pred_region
      _
    $region21: #{tpu_custom_call.1} parent=1 // pred_fallthru
      _
    // Predicated region
    $region22: #{tpu_custom_call.1} parent=1 // pred_check
      _
    $region23: #{tpu_custom_call.1} parent=1 // pred_check_branch
      %24 = sbr.rel (0) target = $region25
    $region24: #{tpu_custom_call.1} parent=1 // pred_region
      _
    $region25: #{tpu_custom_call.1} parent=1 // pred_fallthru
      _
    // Predicated region
    $region26: #{tpu_custom_call.1} parent=1 // pred_check
      _
    $region27: #{tpu_custom_call.1} parent=1 // pred_check_branch
      %26 = sbr.rel (0) target = $region29
    $region28: #{tpu_custom_call.1} parent=1 // pred_region
      _
    $region29: #{tpu_custom_call.1} parent=1 // pred_fallthru
      _
    %v27 = vld [vmem:[%s0] sm:$0xff]
    %v28 = vld [vmem:[%s1] sm:$0xff]
    %v29 = vld [vmem:[%s1 + $0x8] sm:$0x1f]
    %v30 = vld [vmem:[%s2] sm:$0x1]
    %v32 = vlaneseq
    %v33 = vshrl.u32 %v32, 7
    %v34 = vsub.s32 0, %v33
    %v35 = vrot.slane %v30, %v34
    %vm37 = vcmask 105472
    %v39 = vsel %vm37, %v27, 0
    %vm41 = vcmask 1044480
    %v43 = vsel %vm41, %v29, 0
    %45 = vmatprep.subr.mxu0 0.0
    %46 = vmatpush1.msra.mxu0 0.0
    %47 = vmatprep.subr.mxu0 0.0
    %48 = vmatpush1.msra.mxu0 0.0
    %49 = vmatprep.subr.mxu0 0.0
    %50 = vmatpush1.msra.mxu0 0.0
    %51 = vmatprep.subr.mxu0 0.0
    %52 = vmatpush1.msra.mxu0 0.0
    %53 = vmatprep.subr.mxu0 0.0
    %54 = vmatpush1.msra.mxu0 0.0
    %55 = vmatprep.subr.mxu0 0.0
    %56 = vmatpush1.msra.mxu0 0.0
    %57 = vmatprep.subr.mxu0 0.0
    %58 = vmatpush1.msra.mxu0 0.0
    %59 = vmatprep.subr.mxu0 0.0
    %60 = vmatpush1.msra.mxu0 0.0
    %61 = vmatprep.subr.mxu0 0.0
    %62 = vmatpush1.msra.mxu0 0.0
    %63 = vmatprep.subr.mxu0 0.0
    %64 = vmatpush1.msra.mxu0 0.0
    %65 = vmatprep.subr.mxu0 0.0
    %66 = vmatpush1.msra.mxu0 0.0
    %67 = vmatprep.subr.mxu0 0.0
    %68 = vmatpush1.msra.mxu0 0.0
    %69 = vmatprep.subr.mxu0 0.0
    %70 = vmatpush1.msra.mxu0 0.0
    %71 = vmatprep.subr.mxu0 0.0
    %72 = vmatpush1.msra.mxu0 0.0
    %73 = vmatprep.subr.mxu0 0.0
    %74 = vmatpush1.msra.mxu0 %v43
    %75 = vmatprep.subr.mxu0 0.0
    %76 = vmatpush1.msra.mxu0 %v28
    %77 = vmatprep.subr.mxu0 0.0
    %78 = vmatpush2.msra.mxu0 0.0
    %79 = vmatprep.subr.mxu0 0.0
    %80 = vmatpush2.msra.mxu0 0.0
    %81 = vmatprep.subr.mxu0 0.0
    %82 = vmatpush2.msra.mxu0 0.0
    %83 = vmatprep.subr.mxu0 0.0
    %84 = vmatpush2.msra.mxu0 0.0
    %85 = vmatprep.subr.mxu0 0.0
    %86 = vmatpush2.msra.mxu0 0.0
    %87 = vmatprep.subr.mxu0 0.0
    %88 = vmatpush2.msra.mxu0 0.0
    %89 = vmatprep.subr.mxu0 0.0
    %90 = vmatpush2.msra.mxu0 0.0
    %91 = vmatprep.subr.mxu0 0.0
    %92 = vmatpush2.msra.mxu0 0.0
    %93 = vmatprep.subr.mxu0 0.0
    %94 = vmatpush2.msra.mxu0 0.0
    %95 = vmatprep.subr.mxu0 0.0
    %96 = vmatpush2.msra.mxu0 0.0
    %97 = vmatprep.subr.mxu0 0.0
    %98 = vmatpush2.msra.mxu0 0.0
    %99 = vmatprep.subr.mxu0 0.0
    %100 = vmatpush2.msra.mxu0 0.0
    %101 = vmatprep.subr.mxu0 0.0
    %102 = vmatpush2.msra.mxu0 0.0
    %103 = vmatprep.subr.mxu0 0.0
    %104 = vmatpush2.msra.mxu0 0.0
    %105 = vmatprep.subr.mxu0 0.0
    %106 = vmatpush2.msra.mxu0 0.0
    %107 = vmatprep.subr.mxu0 0.0
    %108 = vmatpush2.msra.mxu0 0.0
    %109 = vmatprep.mubr.f32.mxu0 0.0
    %110 = vmatmul.mubr.f32.gmra.mxu0 %v39
    %v111 = vpop.f32.mrf.mxu0
    %v112 = vadd.f32 %v35, %v111
    %v113 = vpop.f32.mrf.mxu0
    %114 = vdwg.mxu0
    %v115 = vmax.f32 %v112, 0.0
    %v116 = vld [vmem:[%s3] sm:$0xff]
    %v117 = vld [vmem:[%s3 + $0x8] sm:$0xff]
    %v118 = vld [vmem:[%s3 + $0x10] sm:$0xff]
    %v119 = vld [vmem:[%s3 + $0x18] sm:$0xff]
    %v120 = vld [vmem:[%s3 + $0x20] sm:$0xff]
    %v121 = vld [vmem:[%s3 + $0x28] sm:$0xff]
    %v122 = vld [vmem:[%s3 + $0x30] sm:$0xff]
    %v123 = vld [vmem:[%s3 + $0x38] sm:$0xff]
    %v124 = vld [vmem:[%s3 + $0x40] sm:$0xff]
    %v125 = vld [vmem:[%s3 + $0x48] sm:$0xff]
    %v126 = vld [vmem:[%s3 + $0x50] sm:$0xff]
    %v127 = vld [vmem:[%s3 + $0x58] sm:$0xff]
    %v128 = vld [vmem:[%s3 + $0x60] sm:$0x1]
    %v129 = vld [vmem:[%s4] sm:$0x1]
    %v131 = vlaneseq
    %v132 = vshrl.u32 %v131, 7
    %v133 = vsub.s32 0, %v132
    %v134 = vrot.slane %v129, %v133
    %vm136 = vcmask 793600
    %v138 = vsel %vm136, %v115, 0
    %vm140 = vcmask 1040384
    %v142 = vsel %vm140, %v128, 0
    %144 = vmatprep.subr.mxu0 0.0
    %145 = vmatpush1.msra.mxu0 0.0
    %146 = vmatprep.subr.mxu0 0.0
    %147 = vmatpush1.msra.mxu0 0.0
    %148 = vmatprep.subr.mxu0 0.0
    %149 = vmatpush1.msra.mxu0 0.0
    %150 = vmatprep.subr.mxu0 0.0
    %151 = vmatpush1.msra.mxu0 %v142
    %152 = vmatprep.subr.mxu0 0.0
    %153 = vmatpush1.msra.mxu0 %v127
    %154 = vmatprep.subr.mxu0 0.0
    %155 = vmatpush1.msra.mxu0 %v126
    %156 = vmatprep.subr.mxu0 0.0
    %157 = vmatpush1.msra.mxu0 %v125
    %158 = vmatprep.subr.mxu0 0.0
    %159 = vmatpush1.msra.mxu0 %v124
    %160 = vmatprep.subr.mxu0 0.0
    %161 = vmatpush1.msra.mxu0 %v123
    %162 = vmatprep.subr.mxu0 0.0
    %163 = vmatpush1.msra.mxu0 %v122
    %164 = vmatprep.subr.mxu0 0.0
    %165 = vmatpush1.msra.mxu0 %v121
    %166 = vmatprep.subr.mxu0 0.0
    %167 = vmatpush1.msra.mxu0 %v120
    %168 = vmatprep.subr.mxu0 0.0
    %169 = vmatpush1.msra.mxu0 %v119
    %170 = vmatprep.subr.mxu0 0.0
    %171 = vmatpush1.msra.mxu0 %v118
    %172 = vmatprep.subr.mxu0 0.0
    %173 = vmatpush1.msra.mxu0 %v117
    %174 = vmatprep.subr.mxu0 0.0
    %175 = vmatpush1.msra.mxu0 %v116
    %176 = vmatprep.subr.mxu0 0.0
    %177 = vmatpush2.msra.mxu0 0.0
    %178 = vmatprep.subr.mxu0 0.0
    %179 = vmatpush2.msra.mxu0 0.0
    %180 = vmatprep.subr.mxu0 0.0
    %181 = vmatpush2.msra.mxu0 0.0
    %182 = vmatprep.subr.mxu0 0.0
    %183 = vmatpush2.msra.mxu0 0.0
    %184 = vmatprep.subr.mxu0 0.0
    %185 = vmatpush2.msra.mxu0 0.0
    %186 = vmatprep.subr.mxu0 0.0
    %187 = vmatpush2.msra.mxu0 0.0
    %188 = vmatprep.subr.mxu0 0.0
    %189 = vmatpush2.msra.mxu0 0.0
    %190 = vmatprep.subr.mxu0 0.0
    %191 = vmatpush2.msra.mxu0 0.0
    %192 = vmatprep.subr.mxu0 0.0
    %193 = vmatpush2.msra.mxu0 0.0
    %194 = vmatprep.subr.mxu0 0.0
    %195 = vmatpush2.msra.mxu0 0.0
    %196 = vmatprep.subr.mxu0 0.0
    %197 = vmatpush2.msra.mxu0 0.0
    %198 = vmatprep.subr.mxu0 0.0
    %199 = vmatpush2.msra.mxu0 0.0
    %200 = vmatprep.subr.mxu0 0.0
    %201 = vmatpush2.msra.mxu0 0.0
    %202 = vmatprep.subr.mxu0 0.0
    %203 = vmatpush2.msra.mxu0 0.0
    %204 = vmatprep.subr.mxu0 0.0
    %205 = vmatpush2.msra.mxu0 0.0
    %206 = vmatprep.subr.mxu0 0.0
    %207 = vmatpush2.msra.mxu0 0.0
    %208 = vmatprep.mubr.f32.mxu0 0.0
    %209 = vmatmul.mubr.f32.gmra.mxu0 %v138
    %v210 = vpop.f32.mrf.mxu0
    %v211 = vadd.f32 %v134, %v210
    %v212 = vpop.f32.mrf.mxu0
    %213 = vdwg.mxu0
    %v214 = vmax.f32 %v211, 0.0
    %v215 = vld [vmem:[%s5] sm:$0xff]
    %v216 = vld [vmem:[%s5 + $0x8] sm:$0x1]
    %v217 = vld [vmem:[%s6] sm:$0x1]
    %v219 = vlaneseq
    %v220 = vshrl.u32 %v219, 7
    %v221 = vsub.s32 0, %v220
    %v222 = vrot.slane %v217, %v221
    %vm224 = vcmask 72704
    %v226 = vsel %vm224, %v214, 0
    %v229 = vsel %vm140, %v216, 0
    %231 = vmatprep.subr.mxu0 0.0
    %232 = vmatpush1.msra.mxu0 0.0
    %233 = vmatprep.subr.mxu0 0.0
    %234 = vmatpush1.msra.mxu0 0.0
    %235 = vmatprep.subr.mxu0 0.0
    %236 = vmatpush1.msra.mxu0 0.0
    %237 = vmatprep.subr.mxu0 0.0
    %238 = vmatpush1.msra.mxu0 0.0
    %239 = vmatprep.subr.mxu0 0.0
    %240 = vmatpush1.msra.mxu0 0.0
    %241 = vmatprep.subr.mxu0 0.0
    %242 = vmatpush1.msra.mxu0 0.0
    %243 = vmatprep.subr.mxu0 0.0
    %244 = vmatpush1.msra.mxu0 0.0
    %245 = vmatprep.subr.mxu0 0.0
    %246 = vmatpush1.msra.mxu0 0.0
    %247 = vmatprep.subr.mxu0 0.0
    %248 = vmatpush1.msra.mxu0 0.0
    %249 = vmatprep.subr.mxu0 0.0
    %250 = vmatpush1.msra.mxu0 0.0
    %251 = vmatprep.subr.mxu0 0.0
    %252 = vmatpush1.msra.mxu0 0.0
    %253 = vmatprep.subr.mxu0 0.0
    %254 = vmatpush1.msra.mxu0 0.0
    %255 = vmatprep.subr.mxu0 0.0
    %256 = vmatpush1.msra.mxu0 0.0
    %257 = vmatprep.subr.mxu0 0.0
    %258 = vmatpush1.msra.mxu0 0.0
    %259 = vmatprep.subr.mxu0 0.0
    %260 = vmatpush1.msra.mxu0 %v229
    %261 = vmatprep.subr.mxu0 0.0
    %262 = vmatpush1.msra.mxu0 %v215
    %263 = vmatprep.subr.mxu0 0.0
    %264 = vmatpush2.msra.mxu0 0.0
    %265 = vmatprep.subr.mxu0 0.0
    %266 = vmatpush2.msra.mxu0 0.0
    %267 = vmatprep.subr.mxu0 0.0
    %268 = vmatpush2.msra.mxu0 0.0
    %269 = vmatprep.subr.mxu0 0.0
    %270 = vmatpush2.msra.mxu0 0.0
    %271 = vmatprep.subr.mxu0 0.0
    %272 = vmatpush2.msra.mxu0 0.0
    %273 = vmatprep.subr.mxu0 0.0
    %274 = vmatpush2.msra.mxu0 0.0
    %275 = vmatprep.subr.mxu0 0.0
    %276 = vmatpush2.msra.mxu0 0.0
    %277 = vmatprep.subr.mxu0 0.0
    %278 = vmatpush2.msra.mxu0 0.0
    %279 = vmatprep.subr.mxu0 0.0
    %280 = vmatpush2.msra.mxu0 0.0
    %281 = vmatprep.subr.mxu0 0.0
    %282 = vmatpush2.msra.mxu0 0.0
    %283 = vmatprep.subr.mxu0 0.0
    %284 = vmatpush2.msra.mxu0 0.0
    %285 = vmatprep.subr.mxu0 0.0
    %286 = vmatpush2.msra.mxu0 0.0
    %287 = vmatprep.subr.mxu0 0.0
    %288 = vmatpush2.msra.mxu0 0.0
    %289 = vmatprep.subr.mxu0 0.0
    %290 = vmatpush2.msra.mxu0 0.0
    %291 = vmatprep.subr.mxu0 0.0
    %292 = vmatpush2.msra.mxu0 0.0
    %293 = vmatprep.subr.mxu0 0.0
    %294 = vmatpush2.msra.mxu0 0.0
    %295 = vmatprep.mubr.f32.mxu0 0.0
    %296 = vmatmul.mubr.f32.gmra.mxu0 %v226
    %v297 = vpop.f32.mrf.mxu0
    %v298 = vadd.f32 %v222, %v297
    %v299 = vpop.f32.mrf.mxu0
    %300 = vdwg.mxu0
    %vm301 = vcmask 56320
    %v302 = vsel %vm301, %v298, -inf
    %303 = vmax.xlane.f32.xlu0 %v302
    %v304 = vpop.xlane.xlu0 %303
    %v305 = vsub.f32 %v298, %v304
    %v306 = vmul.f32 %v305, 1.442695
    %v307 = vpow.pop %v306
    %v308 = vsel %vm301, %v307, 0.0
    %309 = vadd.xlane.f32.xlu0 %v308
    %v310 = vpop.xlane.xlu0 %309
    %v311 = vrcp.pop %v310
    %v312 = vmul.f32 1.0, %v311
    %v313 = vmul.f32 %v307, %v312
    %314 = vst.msk [vmem:[#allocation2] sm:$0xff] %vm301, %v313
    // Predicated region
    $region30: #{tpu_custom_call.1} parent=1 // pred_check
      _
    $region31: #{tpu_custom_call.1} parent=1 // pred_check_branch
      %316 = sbr.rel (0) target = $region33
    $region32: #{tpu_custom_call.1} parent=1 // pred_region
      %s318 = ssub.s32 128, 128
      %319 = vsyncadd [#allocation3], %s318
      %s321 = sshll.u32 [#allocation2], 4
      %s322 = int_to_ptr.vmem [resolvable:$true] %s321
      %324 = dma.vmem_to_hbm [thread:$0]  %s322, 128, %s7, [#allocation3]
    $region33: #{tpu_custom_call.1} parent=1 // pred_fallthru
      _
    // Predicated region
    $region34: #{tpu_custom_call.1} parent=1 // pred_check
      _
    $region35: #{tpu_custom_call.1} parent=1 // pred_check_branch
      %326 = sbr.rel (0) target = $region37
    $region36: #{tpu_custom_call.1} parent=1 // pred_region
      %327 = dma.done [#allocation3], 128
    $region37: #{tpu_custom_call.1} parent=1 // pred_fallthru
      _
    %328 = vsyncpa [#allocation3], 1

</llo_original>
